<compile_context>
chip_gen: v7x
topology: tpu7x:2x2x1
jax: 0.10.0
libtpu: 0.0.40
codegen_flags: <defaults>
</compile_context>

<pallas_src>
import functools

import jax
import jax.numpy as jnp
from jax.experimental import pallas as pl
from jax.experimental.pallas import tpu as pltpu

_NUM_HEADS = 3
_NUM_CLASSES = 2
_OUT_W = _NUM_HEADS * _NUM_CLASSES  # 6 packed output columns


def _classifier_kernel(x_ref, w_ref, b_ref, o_ref):
    # x: (TB, F), w: (F, 6) head-major sign-folded, b: (1, 6), o: (TB, 6)
    logits = jnp.dot(x_ref[...], w_ref[...], preferred_element_type=jnp.float32)
    # 2-class softmax == sigmoid of the (sign-folded) logit; EUP-native logistic.
    o_ref[...] = jax.lax.logistic(logits + b_ref[...]).astype(o_ref.dtype)


@functools.partial(jax.jit, static_argnames=("block_b",))
def classifier_forward(x, params, *, block_b=8192):
    """x: (B, F) float32; params: w1..w3 (F, 2), b1..b3 (1, 2).

    Returns (out1, out2, out3), each (B, 2) softmax probabilities,
    matching `Classifier.forward`.
    """
    B, F = x.shape
    H, C = _NUM_HEADS, _NUM_CLASSES
    assert params["w1"].shape == (F, C)

    # --- fuse heads, fold the 2-class softmax sign into the weights ---------
    # Head-major packing: [h0c0, h0c1, h1c0, h1c1, h2c0, h2c1].
    w_cols, b_cols = [], []
    for h in range(H):
        w = params[f"w{h + 1}"]          # (F, 2)
        b = params[f"b{h + 1}"][0]       # (2,)
        w_cols.append(w[:, 0] - w[:, 1])  # -> sigmoid == p0
        w_cols.append(w[:, 1] - w[:, 0])  # -> sigmoid == p1
        b_cols.append(b[0] - b[1])
        b_cols.append(b[1] - b[0])
    w_fused = jnp.stack(w_cols, axis=1)                   # (F, 6)
    b_fused = jnp.stack(b_cols)[None, :]                  # (1, 6)

    # --- batch tiling --------------------------------------------------------
    # Big tiles: each grid step should move MiB-scale data, not ~100 KiB.
    # block_b is a multiple of 8, so padded-tail tiles keep (8, *) alignment.
    if B <= block_b:
        # Give the grid >= 2 steps (v7x megacore split) when alignment allows.
        if B >= 16 and (B // 2) % 8 == 0:
            tb = B // 2
        else:
            tb = B  # full-extent block is always legal
    else:
        tb = block_b
    grid = (pl.cdiv(B, tb),)

    cost = pl.CostEstimate(
        flops=2 * B * F * _OUT_W,
        transcendentals=B * _OUT_W,
        bytes_accessed=4 * (B * F + F * _OUT_W + _OUT_W + B * _OUT_W),
    )

    probs = pl.pallas_call(
        _classifier_kernel,
        grid=grid,
        in_specs=[
            pl.BlockSpec((tb, F), lambda i: (i, 0)),        # x tile (pipelined)
            pl.BlockSpec((F, _OUT_W), lambda i: (0, 0)),    # fused weight (resident)
            pl.BlockSpec((1, _OUT_W), lambda i: (0, 0)),    # fused bias (resident)
        ],
        out_specs=pl.BlockSpec((tb, _OUT_W), lambda i: (i, 0)),
        out_shape=jax.ShapeDtypeStruct((B, _OUT_W), jnp.float32),
        compiler_params=pltpu.CompilerParams(
            dimension_semantics=("parallel",)),
        cost_estimate=cost,
    )(x, w_fused, b_fused)

    # Head-major packing -> three contiguous (B, 2) slices.
    return tuple(probs[:, 2 * h:2 * h + 2] for h in range(H))


def init_params(key, input_features=64, num_classes=2):
    """Deterministic init mimicking PyTorch nn.Linear default (uniform +/- 1/sqrt(fan_in))."""
    bound = 1.0 / jnp.sqrt(jnp.float32(input_features))
    keys = jax.random.split(key, 6)
    params = {}
    for i in range(3):
        w = jax.random.uniform(keys[2 * i], (input_features, num_classes),
                               minval=-bound, maxval=bound, dtype=jnp.float32)
        b = jax.random.uniform(keys[2 * i + 1], (1, num_classes),
                               minval=-bound, maxval=bound, dtype=jnp.float32)
        params[f"w{i+1}"] = w
        params[f"b{i+1}"] = b
    return params


def reference_forward(x, params):
    """Pure-JAX reference for correctness checking."""
    outs = []
    for i in range(3):
        logits = x @ params[f"w{i+1}"] + params[f"b{i+1}"]
        outs.append(jax.nn.softmax(logits, axis=1))
    return tuple(outs)


def _check(x, params):
    outs = classifier_forward(x, params)
    jax.block_until_ready(outs)
    refs = reference_forward(x, params)
    B = x.shape[0]
    for got, ref in zip(outs, refs):
        assert got.shape == (B, 2)
        assert jnp.allclose(got, ref, atol=1e-5, rtol=1e-5)
        assert jnp.allclose(jnp.sum(got, axis=1), 1.0, atol=1e-5)


if __name__ == "__main__":
    key = jax.random.PRNGKey(0)
    k_x, k_x2, k_p = jax.random.split(key, 3)

    F = 64  # input_features per the module default
    params = init_params(k_p, input_features=F, num_classes=2)

    # Small case matching the module spec (B=2): single full-extent block.
    x_small = jax.random.normal(k_x, (2, F), dtype=jnp.float32)
    _check(x_small, params)

    # Larger batch: exercises the 2-step pipelined / megacore-parallel grid.
    x_big = jax.random.normal(k_x2, (1024, F), dtype=jnp.float32)
    _check(x_big, params)

    print("KERNEL_OK")
</pallas_src>

<mosaic_0001>
module attributes {stable_mosaic.version = 11 : i64} {
  func.func @_classifier_kernel(%arg0: i32, %arg1: memref<2x64xf32, #tpu.memory_space<vmem>>, %arg2: memref<64x6xf32, #tpu.memory_space<vmem>>, %arg3: memref<1x6xf32, #tpu.memory_space<vmem>>, %arg4: memref<2x6xf32, #tpu.memory_space<vmem>>) attributes {dimension_semantics = [#tpu.dimension_semantics<parallel>], iteration_bounds = array<i64: 1>, scalar_prefetch = 0 : i64, scratch_operands = 0 : i64, tpu.core_type = #tpu.core_type<tc>, window_params = [{transform_indices = @transform_0, window_bounds = array<i64: 2, 64>}, {pipeline_mode = #tpu.pipeline_mode<synchronous>, transform_indices = @transform_1, window_bounds = array<i64: 64, 6>}, {pipeline_mode = #tpu.pipeline_mode<synchronous>, transform_indices = @transform_2, window_bounds = array<i64: 1, 6>}, {transform_indices = @transform_3, window_bounds = array<i64: 2, 6>}]} {
    %c0 = arith.constant 0 : index
    %c0_0 = arith.constant 0 : index
    %0 = vector.load %arg1[%c0, %c0_0] : memref<2x64xf32, #tpu.memory_space<vmem>>, vector<2x64xf32>
    %c0_1 = arith.constant 0 : index
    %c0_2 = arith.constant 0 : index
    %1 = vector.load %arg2[%c0_1, %c0_2] : memref<64x6xf32, #tpu.memory_space<vmem>>, vector<64x6xf32>
    %cst = arith.constant dense<0.000000e+00> : vector<2x6xf32>
    %2 = tpu.matmul %0, %1, %cst {dimension_numbers = #tpu.dot_dimension_numbers<[1], [0], [0], [1], [0, 0, 1, 1], [], []>} : vector<2x64xf32>, vector<64x6xf32>, vector<2x6xf32> -> vector<2x6xf32>
    %c0_3 = arith.constant 0 : index
    %c0_4 = arith.constant 0 : index
    %3 = vector.load %arg3[%c0_3, %c0_4] : memref<1x6xf32, #tpu.memory_space<vmem>>, vector<1x6xf32>
    %4 = vector.broadcast %3 : vector<1x6xf32> to vector<2x6xf32>
    %5 = arith.addf %2, %4 : vector<2x6xf32>
    %6 = arith.negf %5 : vector<2x6xf32>
    %7 = math.exp %6 : vector<2x6xf32>
    %cst_5 = arith.constant 1.000000e+00 : f32
    %8 = vector.broadcast %cst_5 : f32 to vector<2x6xf32>
    %9 = arith.addf %8, %7 : vector<2x6xf32>
    %10 = arith.divf %8, %9 : vector<2x6xf32>
    %c0_6 = arith.constant 0 : index
    %c0_7 = arith.constant 0 : index
    %11 = vector.load %arg4[%c0_6, %c0_7] : memref<2x6xf32, #tpu.memory_space<vmem>>, vector<2x6xf32>
    tpu.vector_store %arg4[%c0_6, %c0_7], %10 {strides = array<i32>} : memref<2x6xf32, #tpu.memory_space<vmem>>, vector<2x6xf32>,
    return
  }
  func.func @transform_0(%arg0: i32) -> (i32, i32) {
    %c0_i32 = arith.constant 0 : i32
    %c0_i32_0 = arith.constant 0 : i32
    return %arg0, %c0_i32 : i32, i32
  }
  func.func @transform_1(%arg0: i32) -> (i32, i32) {
    %c0_i32 = arith.constant 0 : i32
    %c0_i32_0 = arith.constant 0 : i32
    %c0_i32_1 = arith.constant 0 : i32
    return %c0_i32, %c0_i32_0 : i32, i32
  }
  func.func @transform_2(%arg0: i32) -> (i32, i32) {
    %c0_i32 = arith.constant 0 : i32
    %c0_i32_0 = arith.constant 0 : i32
    %c0_i32_1 = arith.constant 0 : i32
    return %c0_i32, %c0_i32_0 : i32, i32
  }
  func.func @transform_3(%arg0: i32) -> (i32, i32) {
    %c0_i32 = arith.constant 0 : i32
    %c0_i32_0 = arith.constant 0 : i32
    return %arg0, %c0_i32 : i32, i32
  }
}

</mosaic_0001>

<llo_original>
// kernel: classifier_forward.1
$region0: #{classifier_forward.1}
  #allocation0 [shape = 'u32[]', space=smem, size = 0x4, offset = 0x4, fixed_abs, tag = 'smem constant byte address 0x4 - core index']
  #allocation1 [shape = 'u32[144,128]{1,0:T(1,128)}', space=vmem, size = 0x12000, scoped, tag = 'internal scratch']
  %s0 = inlined_call_operand.vmem [shape: f32[2,64], index: 0, kind: input, shape index: {}]
  %s1 = inlined_call_operand.vmem [shape: f32[64,6], index: 1, kind: input, shape index: {}]
  %s2 = inlined_call_operand.vmem [shape: f32[1,6], index: 2, kind: input, shape index: {}]
  %s3 = inlined_call_operand.vmem [shape: f32[2,6], index: 3, kind: output, shape index: {}]
  %s4 = sld [smem:[#allocation0]]
  $region22: #{classifier_forward.1} parent=0
    _
  %s6 = ssub.s32 1, %s4
  %s7 = scalar_select 0, %s6, %s4
  // Predicated region
  $region2: #{classifier_forward.1} parent=0 // pred_check
    _
  $region3: #{classifier_forward.1} parent=0 // pred_check_branch
    %9 = sbr.rel (0) target = $region5
  $region4: #{classifier_forward.1} parent=0 // pred_region
    _
  $region5: #{classifier_forward.1} parent=0 // pred_fallthru
    _
  // Predicated region
  $region6: #{classifier_forward.1} parent=0 // pred_check
    _
  $region7: #{classifier_forward.1} parent=0 // pred_check_branch
    %11 = sbr.rel (0) target = $region9
  $region8: #{classifier_forward.1} parent=0 // pred_region
    _
  $region9: #{classifier_forward.1} parent=0 // pred_fallthru
    _
  // Predicated region
  $region10: #{classifier_forward.1} parent=0 // pred_check
    _
  $region11: #{classifier_forward.1} parent=0 // pred_check_branch
    %13 = sbr.rel (0) target = $region13
  $region12: #{classifier_forward.1} parent=0 // pred_region
    _
  $region13: #{classifier_forward.1} parent=0 // pred_fallthru
    _
  %v14 = vld [vmem:[%s0] sm:$0x3]
  %v15 = vld [vmem:[%s1] sm:$0xff]
  %v16 = vld [vmem:[%s1 + $0x8] sm:$0xff]
  %v17 = vld [vmem:[%s1 + $0x10] sm:$0xff]
  %v18 = vld [vmem:[%s1 + $0x18] sm:$0xff]
  %v19 = vld [vmem:[%s1 + $0x20] sm:$0xff]
  %v20 = vld [vmem:[%s1 + $0x28] sm:$0xff]
  %v21 = vld [vmem:[%s1 + $0x30] sm:$0xff]
  %v22 = vld [vmem:[%s1 + $0x38] sm:$0xff]
  %v23 = vld [vmem:[%s2] sm:$0x1]
  %v25 = vlaneseq
  %v26 = vshrl.u32 %v25, 7
  %v27 = vsub.s32 0, %v26
  %v28 = vrot.slane %v23, %v27
  %vm30 = vcmask 523264
  %v32 = vsel %vm30, %v14, 0
  %34 = vmatprep.subr.mxu0 0.0
  %35 = vmatpush1.msra.mxu0 %v15
  %36 = vmatprep.subr.mxu0 0.0
  %37 = vmatpush1.msra.mxu0 %v16
  %38 = vmatprep.subr.mxu0 0.0
  %39 = vmatpush1.msra.mxu0 %v17
  %40 = vmatprep.subr.mxu0 0.0
  %41 = vmatpush1.msra.mxu0 %v18
  %42 = vmatprep.subr.mxu0 0.0
  %43 = vmatpush1.msra.mxu0 %v19
  %44 = vmatprep.subr.mxu0 0.0
  %45 = vmatpush1.msra.mxu0 %v20
  %46 = vmatprep.subr.mxu0 0.0
  %47 = vmatpush1.msra.mxu0 %v21
  %48 = vmatprep.subr.mxu0 0.0
  %49 = vmatpush1.msra.mxu0 %v22
  %50 = vmatprep.subr.mxu0 0.0
  %51 = vmatpush1.msra.mxu0 0.0
  %52 = vmatprep.subr.mxu0 0.0
  %53 = vmatpush1.msra.mxu0 0.0
  %54 = vmatprep.subr.mxu0 0.0
  %55 = vmatpush1.msra.mxu0 0.0
  %56 = vmatprep.subr.mxu0 0.0
  %57 = vmatpush1.msra.mxu0 0.0
  %58 = vmatprep.subr.mxu0 0.0
  %59 = vmatpush1.msra.mxu0 0.0
  %60 = vmatprep.subr.mxu0 0.0
  %61 = vmatpush1.msra.mxu0 0.0
  %62 = vmatprep.subr.mxu0 0.0
  %63 = vmatpush1.msra.mxu0 0.0
  %64 = vmatprep.subr.mxu0 0.0
  %65 = vmatpush1.msra.mxu0 0.0
  %66 = vmatprep.subr.mxu0 0.0
  %67 = vmatpush1.msra.mxu0 0.0
  %68 = vmatprep.subr.mxu0 0.0
  %69 = vmatpush1.msra.mxu0 0.0
  %70 = vmatprep.subr.mxu0 0.0
  %71 = vmatpush1.msra.mxu0 0.0
  %72 = vmatprep.subr.mxu0 0.0
  %73 = vmatpush1.msra.mxu0 0.0
  %74 = vmatprep.subr.mxu0 0.0
  %75 = vmatpush1.msra.mxu0 0.0
  %76 = vmatprep.subr.mxu0 0.0
  %77 = vmatpush1.msra.mxu0 0.0
  %78 = vmatprep.subr.mxu0 0.0
  %79 = vmatpush1.msra.mxu0 0.0
  %80 = vmatprep.subr.mxu0 0.0
  %81 = vmatpush1.msra.mxu0 0.0
  %82 = vmatprep.subr.mxu0 0.0
  %83 = vmatpush1.msra.mxu0 0.0
  %84 = vmatprep.subr.mxu0 0.0
  %85 = vmatpush1.msra.mxu0 0.0
  %86 = vmatprep.subr.mxu0 0.0
  %87 = vmatpush1.msra.mxu0 0.0
  %88 = vmatprep.subr.mxu0 0.0
  %89 = vmatpush1.msra.mxu0 0.0
  %90 = vmatprep.subr.mxu0 0.0
  %91 = vmatpush1.msra.mxu0 0.0
  %92 = vmatprep.subr.mxu0 0.0
  %93 = vmatpush1.msra.mxu0 0.0
  %94 = vmatprep.subr.mxu0 0.0
  %95 = vmatpush1.msra.mxu0 0.0
  %96 = vmatprep.subr.mxu0 0.0
  %97 = vmatpush1.msra.mxu0 0.0
  %98 = vmatprep.mubr.f32.mxu0 0.0
  %99 = vmatmul.mubr.f32.gmra.mrb[0].mxu0 %v32
  %v100 = vpop.f32.mrb[0].mxu0
  %v101 = vadd.f32 %v28, %v100
  %v102 = vpop.f32.mrb[0].mxu0
  %103 = vdwg.mxu0
  %v104 = vxor.u32 %v101, 2147483648
  %v105 = vmul.f32 %v104, 1.442695
  %v106 = vpow.pop %v105
  %v107 = vadd.f32 %v106, 1.0
  %v108 = vrcp.pop %v107
  %v109 = vmul.f32 1.0, %v108
  %vm110 = vcmask 41984
  %111 = vst.msk [vmem:[%s3] sm:$0x3] %vm110, %v109
  // Predicated region
  $region14: #{classifier_forward.1} parent=0 // pred_check
    _
  $region15: #{classifier_forward.1} parent=0 // pred_check_branch
    %113 = sbr.rel (0) target = $region17
  $region16: #{classifier_forward.1} parent=0 // pred_region
    _
  $region17: #{classifier_forward.1} parent=0 // pred_fallthru
    _
  // Predicated region
  $region18: #{classifier_forward.1} parent=0 // pred_check
    _
  $region19: #{classifier_forward.1} parent=0 // pred_check_branch
    %115 = sbr.rel (0) target = $region21
  $region20: #{classifier_forward.1} parent=0 // pred_region
    _
  $region21: #{classifier_forward.1} parent=0 // pred_fallthru
    _

</llo_original>
